<compile_context>
chip_gen: v6e
topology: v6e:2x2x1
jax: 0.10.0
libtpu: 0.0.40
codegen_flags: <defaults>
</compile_context>

<pallas_src>
import functools

import jax
import jax.numpy as jnp
from jax.experimental import pallas as pl
from jax.experimental.pallas import tpu as pltpu

OUTPUT_SIZE = 3


def _round_up(n, m):
    return ((n + m - 1) // m) * m


def _mlp_kernel(*refs, num_layers):
    # refs = (x_ref, w0, b0, w1, b1, ..., w_{L-1}, b_{L-1}, o_ref)
    x_ref = refs[0]
    o_ref = refs[-1]
    param_refs = refs[1:-1]

    h = None
    for i in range(num_layers):
        w = param_refs[2 * i][...]                           # (in, out), f32 or bf16
        b = param_refs[2 * i + 1][...].astype(jnp.float32)   # (1, out), always f32
        if i == 0:
            lhs = x_ref[...]
        else:
            lhs = h
        # Feed the MXU in the weight dtype (single cast, no up/down round trip),
        # accumulate in f32.
        if lhs.dtype != w.dtype:
            lhs = lhs.astype(w.dtype)
        h = jnp.dot(lhs, w, preferred_element_type=jnp.float32) + b
        if i < num_layers - 1:  # ReLU after every hidden Linear, not the last one
            h = jnp.maximum(h, 0.0)
    o_ref[...] = h.astype(o_ref.dtype)


def _prepare_operands(params, weight_dtype):
    """Cast weights to the MXU dtype, keep biases f32 as (1, out) rows."""
    ops = []
    for w, b in params:
        ops.append(w.astype(weight_dtype))
        ops.append(b.reshape(1, -1).astype(jnp.float32))
    return ops


def gaze_mlp_forward(x, params, *, tile_m=4096, small_batch_max=512,
                     use_bf16_weights=False, vmem_limit_bytes=None):
    """x: (batch, input_size) f32 or bf16. params: list of (W (in,out), b (out,))."""
    batch, input_size = x.shape
    num_layers = len(params)
    out_dim = params[-1][0].shape[1]
    weight_dtype = jnp.bfloat16 if use_bf16_weights else jnp.float32
    ops = _prepare_operands(params, weight_dtype)
    kernel = functools.partial(_mlp_kernel, num_layers=num_layers)
    out_shape = jax.ShapeDtypeStruct((batch, out_dim), jnp.float32)

    if batch <= small_batch_max:
        # ---- Small-batch path: no grid, everything unblocked in VMEM. ----
        vspec = pl.BlockSpec(memory_space=pltpu.MemorySpace.VMEM)
        return pl.pallas_call(
            kernel,
            out_shape=out_shape,
            in_specs=[vspec] * (1 + 2 * num_layers),
            out_specs=vspec,
        )(x, *ops)

    # ---- Batch-tiled path: pipeline x/out over HBM, keep weights resident. ----
    # bf16 LHS packs 16 rows per sublane group; f32 needs 8.
    row_align = 16 if (use_bf16_weights or x.dtype == jnp.bfloat16) else 8
    # At least 2 tiles so dimension_semantics=("parallel",) can shard the grid
    # across v7x's two TensorCores (harmless on single-TC v5e/v6e).
    half = _round_up(-(-batch // 2), row_align)
    eff_tile = max(row_align, min(_round_up(tile_m, row_align), half))
    assert eff_tile % row_align == 0
    grid = (pl.cdiv(batch, eff_tile),)   # ragged last block handled by Pallas masking

    in_specs = [pl.BlockSpec((eff_tile, input_size), lambda i: (i, 0))]
    for op in ops:
        # Constant index_map -> weights/biases stay VMEM-resident across steps.
        in_specs.append(pl.BlockSpec(op.shape, lambda i: (0, 0)))
    out_specs = pl.BlockSpec((eff_tile, out_dim), lambda i: (i, 0))

    return pl.pallas_call(
        kernel,
        out_shape=out_shape,
        grid=grid,
        in_specs=in_specs,
        out_specs=out_specs,
        compiler_params=pltpu.CompilerParams(
            dimension_semantics=("parallel",),   # megacore sharding on v7x
            vmem_limit_bytes=vmem_limit_bytes),
    )(x, *ops)


def init_gaze_mlp_params(key, instance_size, window_size=3, hidden_sizes=None,
                         dtype=jnp.float32):
    """Deterministic init mirroring nn.Linear's U(-1/sqrt(fan_in), 1/sqrt(fan_in))."""
    if hidden_sizes is None:
        hidden_sizes = []
    input_size = instance_size * window_size
    dims = [input_size] + list(hidden_sizes) + [OUTPUT_SIZE]
    params = []
    for in_dim, out_dim in zip(dims[:-1], dims[1:]):
        key, kw, kb = jax.random.split(key, 3)
        bound = 1.0 / (in_dim ** 0.5)
        w = jax.random.uniform(kw, (in_dim, out_dim), dtype, -bound, bound)
        b = jax.random.uniform(kb, (out_dim,), dtype, -bound, bound)
        params.append((w, b))
    return params


def gaze_mlp_reference(x, params):
    h = x.astype(jnp.float32)
    for i, (w, b) in enumerate(params):
        h = h @ w + b
        if i < len(params) - 1:
            h = jnp.maximum(h, 0.0)
    return h


if __name__ == "__main__":
    key = jax.random.PRNGKey(0)
    key, kx1, kx2 = jax.random.split(key, 3)

    # Shapes consistent with the module: instance_size=8, window_size=3
    # -> input_size=24; two hidden layers of 32; output size 3.
    instance_size = 8
    window_size = 3
    hidden_sizes = [32, 32]
    input_size = instance_size * window_size

    params = init_gaze_mlp_params(key, instance_size, window_size, hidden_sizes)

    # --- Small-batch path (no grid, unblocked VMEM operands, narrow output). ---
    x_small = jax.random.normal(kx1, (8, input_size), jnp.float32)
    out_small = jax.block_until_ready(gaze_mlp_forward(x_small, params))
    ref_small = gaze_mlp_reference(x_small, params)
    assert out_small.shape == (8, OUTPUT_SIZE)
    assert jnp.allclose(out_small, ref_small, atol=1e-5, rtol=1e-5), "small-path mismatch"

    # --- Batch-tiled path: cdiv grid with a ragged last block (300 = 2*128 + 44),
    #     weights VMEM-resident, parallel batch axis, (tile, 3) output blocks. ---
    x_big = jax.random.normal(kx2, (300, input_size), jnp.float32)
    out_big = jax.block_until_ready(
        gaze_mlp_forward(x_big, params, tile_m=128, small_batch_max=64))
    ref_big = gaze_mlp_reference(x_big, params)
    assert out_big.shape == (300, OUTPUT_SIZE)
    assert jnp.allclose(out_big, ref_big, atol=1e-5, rtol=1e-5), "tiled-path mismatch"

    # --- bf16-weights-on-MXU variant (f32 accumulate, f32 epilogue). ---
    out_bf16w = jax.block_until_ready(
        gaze_mlp_forward(x_small, params, use_bf16_weights=True))
    assert jnp.allclose(out_bf16w, ref_small, atol=5e-2, rtol=5e-2), "bf16-weight mismatch"

    # --- bf16 activations (halves the dominant HBM read of x), tiled path. ---
    out_bf16x = jax.block_until_ready(
        gaze_mlp_forward(x_big.astype(jnp.bfloat16), params,
                         tile_m=128, small_batch_max=64, use_bf16_weights=True))
    assert out_bf16x.shape == (300, OUTPUT_SIZE)
    assert jnp.allclose(out_bf16x, ref_big, atol=5e-2, rtol=5e-2), "bf16-input mismatch"

    print("KERNEL_OK")
</pallas_src>

<mosaic_0001>
module attributes {stable_mosaic.version = 11 : i64} {
  func.func @_mlp_kernel(%arg0: memref<8x24xf32, #tpu.memory_space<vmem>>, %arg1: memref<24x32xf32, #tpu.memory_space<vmem>>, %arg2: memref<1x32xf32, #tpu.memory_space<vmem>>, %arg3: memref<32x32xf32, #tpu.memory_space<vmem>>, %arg4: memref<1x32xf32, #tpu.memory_space<vmem>>, %arg5: memref<32x3xf32, #tpu.memory_space<vmem>>, %arg6: memref<1x3xf32, #tpu.memory_space<vmem>>, %arg7: memref<8x3xf32, #tpu.memory_space<vmem>>) attributes {dimension_semantics = [], scalar_prefetch = 0 : i64, scratch_operands = 0 : i64, tpu.core_type = #tpu.core_type<tc>} {
    %c0 = arith.constant 0 : index
    %c0_0 = arith.constant 0 : index
    %0 = vector.load %arg1[%c0, %c0_0] : memref<24x32xf32, #tpu.memory_space<vmem>>, vector<24x32xf32>
    %c0_1 = arith.constant 0 : index
    %c0_2 = arith.constant 0 : index
    %1 = vector.load %arg2[%c0_1, %c0_2] : memref<1x32xf32, #tpu.memory_space<vmem>>, vector<1x32xf32>
    %c0_3 = arith.constant 0 : index
    %c0_4 = arith.constant 0 : index
    %2 = vector.load %arg0[%c0_3, %c0_4] : memref<8x24xf32, #tpu.memory_space<vmem>>, vector<8x24xf32>
    %cst = arith.constant dense<0.000000e+00> : vector<8x32xf32>
    %3 = tpu.matmul %2, %0, %cst {dimension_numbers = #tpu.dot_dimension_numbers<[1], [0], [0], [1], [0, 0, 1, 1], [], []>} : vector<8x24xf32>, vector<24x32xf32>, vector<8x32xf32> -> vector<8x32xf32>
    %4 = vector.broadcast %1 : vector<1x32xf32> to vector<8x32xf32>
    %5 = arith.addf %3, %4 : vector<8x32xf32>
    %cst_5 = arith.constant 0.000000e+00 : f32
    %6 = vector.broadcast %cst_5 : f32 to vector<8x32xf32>
    %7 = arith.maximumf %5, %6 : vector<8x32xf32>
    %c0_6 = arith.constant 0 : index
    %c0_7 = arith.constant 0 : index
    %8 = vector.load %arg3[%c0_6, %c0_7] : memref<32x32xf32, #tpu.memory_space<vmem>>, vector<32x32xf32>
    %c0_8 = arith.constant 0 : index
    %c0_9 = arith.constant 0 : index
    %9 = vector.load %arg4[%c0_8, %c0_9] : memref<1x32xf32, #tpu.memory_space<vmem>>, vector<1x32xf32>
    %cst_10 = arith.constant dense<0.000000e+00> : vector<8x32xf32>
    %10 = tpu.matmul %7, %8, %cst_10 {dimension_numbers = #tpu.dot_dimension_numbers<[1], [0], [0], [1], [0, 0, 1, 1], [], []>} : vector<8x32xf32>, vector<32x32xf32>, vector<8x32xf32> -> vector<8x32xf32>
    %11 = vector.broadcast %9 : vector<1x32xf32> to vector<8x32xf32>
    %12 = arith.addf %10, %11 : vector<8x32xf32>
    %cst_11 = arith.constant 0.000000e+00 : f32
    %13 = vector.broadcast %cst_11 : f32 to vector<8x32xf32>
    %14 = arith.maximumf %12, %13 : vector<8x32xf32>
    %c0_12 = arith.constant 0 : index
    %c0_13 = arith.constant 0 : index
    %15 = vector.load %arg5[%c0_12, %c0_13] : memref<32x3xf32, #tpu.memory_space<vmem>>, vector<32x3xf32>
    %c0_14 = arith.constant 0 : index
    %c0_15 = arith.constant 0 : index
    %16 = vector.load %arg6[%c0_14, %c0_15] : memref<1x3xf32, #tpu.memory_space<vmem>>, vector<1x3xf32>
    %cst_16 = arith.constant dense<0.000000e+00> : vector<8x3xf32>
    %17 = tpu.matmul %14, %15, %cst_16 {dimension_numbers = #tpu.dot_dimension_numbers<[1], [0], [0], [1], [0, 0, 1, 1], [], []>} : vector<8x32xf32>, vector<32x3xf32>, vector<8x3xf32> -> vector<8x3xf32>
    %18 = vector.broadcast %16 : vector<1x3xf32> to vector<8x3xf32>
    %19 = arith.addf %17, %18 : vector<8x3xf32>
    %c0_17 = arith.constant 0 : index
    %c0_18 = arith.constant 0 : index
    %20 = vector.load %arg7[%c0_17, %c0_18] : memref<8x3xf32, #tpu.memory_space<vmem>>, vector<8x3xf32>
    tpu.vector_store %arg7[%c0_17, %c0_18], %19 {strides = array<i32>} : memref<8x3xf32, #tpu.memory_space<vmem>>, vector<8x3xf32>,
    return
  }
}

</mosaic_0001>

<llo_original>
// kernel: tpu_custom_call.1
$region0: #{tpu_custom_call.1}
  #allocation0 [shape = 'u32[]', space=smem, size = 0x4, offset = 0x4, fixed_abs, tag = 'smem constant byte address 0x4 - core index']
  #allocation1 [shape = 'u32[144,128]{1,0:T(1,128)}', space=vmem, size = 0x12000, scoped, tag = 'internal scratch']
  %s0 = inlined_call_operand.vmem [shape: f32[8,24], index: 0, kind: input, shape index: {}]
  %s1 = inlined_call_operand.hbm [shape: f32[24,32], index: 1, kind: input, shape index: {}]
  %s2 = inlined_call_operand.vmem [shape: f32[1,32], index: 2, kind: input, shape index: {}]
  %s3 = inlined_call_operand.vmem [shape: f32[32,32], index: 3, kind: input, shape index: {}]
  %s4 = inlined_call_operand.hbm [shape: f32[1,32], index: 4, kind: input, shape index: {}]
  %s5 = inlined_call_operand.vmem [shape: f32[32,3], index: 5, kind: input, shape index: {}]
  %s6 = inlined_call_operand.vmem [shape: f32[1,3], index: 6, kind: input, shape index: {}]
  %s7 = inlined_call_operand.vmem [shape: f32[8,3], index: 7, kind: output, shape index: {}]
  %s8 = sld [smem:[#allocation0]]
  $region46: #{tpu_custom_call.1} parent=0
    _
  %s10 = ssub.s32 1, %s8
  %s11 = scalar_select 0, %s10, %s8
  $region1: #{tpu_custom_call.1} parent=0
    #allocation2 [shape = 'u8[12288]{0}', space=vmem, size = 0x3000, scoped, tag = 'input window, operand 1, single buffered']
    #allocation3 [shape = 's32[1]{0}', space=sflag, size = 0x4, scoped, tag = 'scoped memory for tpu_custom_call.1']
    #allocation4 [shape = 'u8[512]{0}', space=vmem, size = 0x400, scoped, tag = 'input window, operand 4, single buffered']
    #allocation5 [shape = 's32[1]{0}', space=sflag, size = 0x4, scoped, tag = 'scoped memory for tpu_custom_call.1']
    %12 = vsyncpa [#allocation3], 0
    %13 = vsyncpa [#allocation5], 0
    // Predicated region
    $region2: #{tpu_custom_call.1} parent=1 // pred_check
      _
    $region3: #{tpu_custom_call.1} parent=1 // pred_check_branch
      %15 = sbr.rel (0) target = $region5
    $region4: #{tpu_custom_call.1} parent=1 // pred_region
      _
    $region5: #{tpu_custom_call.1} parent=1 // pred_fallthru
      _
    // Predicated region
    $region6: #{tpu_custom_call.1} parent=1 // pred_check
      _
    $region7: #{tpu_custom_call.1} parent=1 // pred_check_branch
      %17 = sbr.rel (0) target = $region9
    $region8: #{tpu_custom_call.1} parent=1 // pred_region
      %s19 = ssub.s32 384, 384
      %20 = vsyncadd [#allocation3], %s19
      %s21 = sshll.u32 [#allocation2], 4
      %s22 = int_to_ptr.vmem [resolvable:$true] %s21
      %27 = dma.hbm_to_vmem [thread:$0]  %s1, 384, %s22, [#allocation3], 128, 128, 8
    $region9: #{tpu_custom_call.1} parent=1 // pred_fallthru
      _
    // Predicated region
    $region10: #{tpu_custom_call.1} parent=1 // pred_check
      _
    $region11: #{tpu_custom_call.1} parent=1 // pred_check_branch
      %29 = sbr.rel (0) target = $region13
    $region12: #{tpu_custom_call.1} parent=1 // pred_region
      _
    $region13: #{tpu_custom_call.1} parent=1 // pred_fallthru
      _
    // Predicated region
    $region14: #{tpu_custom_call.1} parent=1 // pred_check
      _
    $region15: #{tpu_custom_call.1} parent=1 // pred_check_branch
      %31 = sbr.rel (0) target = $region17
    $region16: #{tpu_custom_call.1} parent=1 // pred_region
      _
    $region17: #{tpu_custom_call.1} parent=1 // pred_fallthru
      _
    // Predicated region
    $region18: #{tpu_custom_call.1} parent=1 // pred_check
      _
    $region19: #{tpu_custom_call.1} parent=1 // pred_check_branch
      %33 = sbr.rel (0) target = $region21
    $region20: #{tpu_custom_call.1} parent=1 // pred_region
      %s35 = ssub.s32 16, 16
      %36 = vsyncadd [#allocation5], %s35
      %s38 = sshll.u32 [#allocation4], 4
      %s39 = int_to_ptr.vmem [resolvable:$true] %s38
      %41 = dma.hbm_to_vmem [thread:$0]  %s4, 16, %s39, [#allocation5]
    $region21: #{tpu_custom_call.1} parent=1 // pred_fallthru
      _
    // Predicated region
    $region22: #{tpu_custom_call.1} parent=1 // pred_check
      _
    $region23: #{tpu_custom_call.1} parent=1 // pred_check_branch
      %43 = sbr.rel (0) target = $region25
    $region24: #{tpu_custom_call.1} parent=1 // pred_region
      _
    $region25: #{tpu_custom_call.1} parent=1 // pred_fallthru
      _
    // Predicated region
    $region26: #{tpu_custom_call.1} parent=1 // pred_check
      _
    $region27: #{tpu_custom_call.1} parent=1 // pred_check_branch
      %45 = sbr.rel (0) target = $region29
    $region28: #{tpu_custom_call.1} parent=1 // pred_region
      _
    $region29: #{tpu_custom_call.1} parent=1 // pred_fallthru
      _
    // Predicated region
    $region30: #{tpu_custom_call.1} parent=1 // pred_check
      _
    $region31: #{tpu_custom_call.1} parent=1 // pred_check_branch
      %47 = sbr.rel (0) target = $region33
    $region32: #{tpu_custom_call.1} parent=1 // pred_region
      %48 = dma.done [#allocation3], 384
    $region33: #{tpu_custom_call.1} parent=1 // pred_fallthru
      _
    // Predicated region
    $region34: #{tpu_custom_call.1} parent=1 // pred_check
      _
    $region35: #{tpu_custom_call.1} parent=1 // pred_check_branch
      %50 = sbr.rel (0) target = $region37
    $region36: #{tpu_custom_call.1} parent=1 // pred_region
      %51 = dma.done [#allocation5], 16
    $region37: #{tpu_custom_call.1} parent=1 // pred_fallthru
      _
    %v52 = vld [vmem:[#allocation2] sm:$0xff]
    %v53 = vld [vmem:[#allocation2 + $0x8] sm:$0xff]
    %v54 = vld [vmem:[#allocation2 + $0x10] sm:$0xff]
    %v55 = vld [vmem:[%s2] sm:$0x1]
    %v56 = vld [vmem:[%s0] sm:$0xff]
    %v58 = vlaneseq
    %v59 = vshrl.u32 %v58, 7
    %v60 = vsub.s32 0, %v59
    %v61 = vrot.slane %v55, %v60
    %vm63 = vcmask 195584
    %v65 = vsel %vm63, %v56, 0
    %67 = vmatprep.subr.mxu0 0.0
    %68 = vmatpush1.msra.mxu0 0.0
    %69 = vmatprep.subr.mxu0 0.0
    %70 = vmatpush1.msra.mxu0 0.0
    %71 = vmatprep.subr.mxu0 0.0
    %72 = vmatpush1.msra.mxu0 0.0
    %73 = vmatprep.subr.mxu0 0.0
    %74 = vmatpush1.msra.mxu0 0.0
    %75 = vmatprep.subr.mxu0 0.0
    %76 = vmatpush1.msra.mxu0 0.0
    %77 = vmatprep.subr.mxu0 0.0
    %78 = vmatpush1.msra.mxu0 0.0
    %79 = vmatprep.subr.mxu0 0.0
    %80 = vmatpush1.msra.mxu0 0.0
    %81 = vmatprep.subr.mxu0 0.0
    %82 = vmatpush1.msra.mxu0 0.0
    %83 = vmatprep.subr.mxu0 0.0
    %84 = vmatpush1.msra.mxu0 0.0
    %85 = vmatprep.subr.mxu0 0.0
    %86 = vmatpush1.msra.mxu0 0.0
    %87 = vmatprep.subr.mxu0 0.0
    %88 = vmatpush1.msra.mxu0 0.0
    %89 = vmatprep.subr.mxu0 0.0
    %90 = vmatpush1.msra.mxu0 0.0
    %91 = vmatprep.subr.mxu0 0.0
    %92 = vmatpush1.msra.mxu0 0.0
    %93 = vmatprep.subr.mxu0 0.0
    %94 = vmatpush1.msra.mxu0 %v54
    %95 = vmatprep.subr.mxu0 0.0
    %96 = vmatpush1.msra.mxu0 %v53
    %97 = vmatprep.subr.mxu0 0.0
    %98 = vmatpush1.msra.mxu0 %v52
    %99 = vmatprep.subr.mxu0 0.0
    %100 = vmatpush2.msra.mxu0 0.0
    %101 = vmatprep.subr.mxu0 0.0
    %102 = vmatpush2.msra.mxu0 0.0
    %103 = vmatprep.subr.mxu0 0.0
    %104 = vmatpush2.msra.mxu0 0.0
    %105 = vmatprep.subr.mxu0 0.0
    %106 = vmatpush2.msra.mxu0 0.0
    %107 = vmatprep.subr.mxu0 0.0
    %108 = vmatpush2.msra.mxu0 0.0
    %109 = vmatprep.subr.mxu0 0.0
    %110 = vmatpush2.msra.mxu0 0.0
    %111 = vmatprep.subr.mxu0 0.0
    %112 = vmatpush2.msra.mxu0 0.0
    %113 = vmatprep.subr.mxu0 0.0
    %114 = vmatpush2.msra.mxu0 0.0
    %115 = vmatprep.subr.mxu0 0.0
    %116 = vmatpush2.msra.mxu0 0.0
    %117 = vmatprep.subr.mxu0 0.0
    %118 = vmatpush2.msra.mxu0 0.0
    %119 = vmatprep.subr.mxu0 0.0
    %120 = vmatpush2.msra.mxu0 0.0
    %121 = vmatprep.subr.mxu0 0.0
    %122 = vmatpush2.msra.mxu0 0.0
    %123 = vmatprep.subr.mxu0 0.0
    %124 = vmatpush2.msra.mxu0 0.0
    %125 = vmatprep.subr.mxu0 0.0
    %126 = vmatpush2.msra.mxu0 0.0
    %127 = vmatprep.subr.mxu0 0.0
    %128 = vmatpush2.msra.mxu0 0.0
    %129 = vmatprep.subr.mxu0 0.0
    %130 = vmatpush2.msra.mxu0 0.0
    %131 = vmatprep.mubr.f32.mxu0 0.0
    %132 = vmatmul.mubr.f32.gmra.mxu0 %v65
    %v133 = vpop.f32.mrf.mxu0
    %v134 = vadd.f32 %v61, %v133
    %v135 = vpop.f32.mrf.mxu0
    %136 = vdwg.mxu0
    %v137 = vmax.f32 %v134, 0.0
    %v138 = vld [vmem:[%s3] sm:$0xff]
    %v139 = vld [vmem:[%s3 + $0x8] sm:$0xff]
    %v140 = vld [vmem:[%s3 + $0x10] sm:$0xff]
    %v141 = vld [vmem:[%s3 + $0x18] sm:$0xff]
    %v142 = vld [vmem:[#allocation4] sm:$0x1]
    %v144 = vlaneseq
    %v145 = vshrl.u32 %v144, 7
    %v146 = vsub.s32 0, %v145
    %v147 = vrot.slane %v142, %v146
    %vm149 = vcmask 261120
    %v151 = vsel %vm149, %v137, 0
    %153 = vmatprep.subr.mxu0 0.0
    %154 = vmatpush1.msra.mxu0 0.0
    %155 = vmatprep.subr.mxu0 0.0
    %156 = vmatpush1.msra.mxu0 0.0
    %157 = vmatprep.subr.mxu0 0.0
    %158 = vmatpush1.msra.mxu0 0.0
    %159 = vmatprep.subr.mxu0 0.0
    %160 = vmatpush1.msra.mxu0 0.0
    %161 = vmatprep.subr.mxu0 0.0
    %162 = vmatpush1.msra.mxu0 0.0
    %163 = vmatprep.subr.mxu0 0.0
    %164 = vmatpush1.msra.mxu0 0.0
    %165 = vmatprep.subr.mxu0 0.0
    %166 = vmatpush1.msra.mxu0 0.0
    %167 = vmatprep.subr.mxu0 0.0
    %168 = vmatpush1.msra.mxu0 0.0
    %169 = vmatprep.subr.mxu0 0.0
    %170 = vmatpush1.msra.mxu0 0.0
    %171 = vmatprep.subr.mxu0 0.0
    %172 = vmatpush1.msra.mxu0 0.0
    %173 = vmatprep.subr.mxu0 0.0
    %174 = vmatpush1.msra.mxu0 0.0
    %175 = vmatprep.subr.mxu0 0.0
    %176 = vmatpush1.msra.mxu0 0.0
    %177 = vmatprep.subr.mxu0 0.0
    %178 = vmatpush1.msra.mxu0 %v141
    %179 = vmatprep.subr.mxu0 0.0
    %180 = vmatpush1.msra.mxu0 %v140
    %181 = vmatprep.subr.mxu0 0.0
    %182 = vmatpush1.msra.mxu0 %v139
    %183 = vmatprep.subr.mxu0 0.0
    %184 = vmatpush1.msra.mxu0 %v138
    %185 = vmatprep.subr.mxu0 0.0
    %186 = vmatpush2.msra.mxu0 0.0
    %187 = vmatprep.subr.mxu0 0.0
    %188 = vmatpush2.msra.mxu0 0.0
    %189 = vmatprep.subr.mxu0 0.0
    %190 = vmatpush2.msra.mxu0 0.0
    %191 = vmatprep.subr.mxu0 0.0
    %192 = vmatpush2.msra.mxu0 0.0
    %193 = vmatprep.subr.mxu0 0.0
    %194 = vmatpush2.msra.mxu0 0.0
    %195 = vmatprep.subr.mxu0 0.0
    %196 = vmatpush2.msra.mxu0 0.0
    %197 = vmatprep.subr.mxu0 0.0
    %198 = vmatpush2.msra.mxu0 0.0
    %199 = vmatprep.subr.mxu0 0.0
    %200 = vmatpush2.msra.mxu0 0.0
    %201 = vmatprep.subr.mxu0 0.0
    %202 = vmatpush2.msra.mxu0 0.0
    %203 = vmatprep.subr.mxu0 0.0
    %204 = vmatpush2.msra.mxu0 0.0
    %205 = vmatprep.subr.mxu0 0.0
    %206 = vmatpush2.msra.mxu0 0.0
    %207 = vmatprep.subr.mxu0 0.0
    %208 = vmatpush2.msra.mxu0 0.0
    %209 = vmatprep.subr.mxu0 0.0
    %210 = vmatpush2.msra.mxu0 0.0
    %211 = vmatprep.subr.mxu0 0.0
    %212 = vmatpush2.msra.mxu0 0.0
    %213 = vmatprep.subr.mxu0 0.0
    %214 = vmatpush2.msra.mxu0 0.0
    %215 = vmatprep.subr.mxu0 0.0
    %216 = vmatpush2.msra.mxu0 0.0
    %217 = vmatprep.mubr.f32.mxu0 0.0
    %218 = vmatmul.mubr.f32.gmra.mxu0 %v151
    %v219 = vpop.f32.mrf.mxu0
    %v220 = vadd.f32 %v147, %v219
    %v221 = vpop.f32.mrf.mxu0
    %222 = vdwg.mxu0
    %v223 = vmax.f32 %v220, 0.0
    %v224 = vld [vmem:[%s5] sm:$0xff]
    %v225 = vld [vmem:[%s5 + $0x8] sm:$0xff]
    %v226 = vld [vmem:[%s5 + $0x10] sm:$0xff]
    %v227 = vld [vmem:[%s5 + $0x18] sm:$0xff]
    %v228 = vld [vmem:[%s6] sm:$0x1]
    %v230 = vlaneseq
    %v231 = vshrl.u32 %v230, 7
    %v232 = vsub.s32 0, %v231
    %v233 = vrot.slane %v228, %v232
    %v236 = vsel %vm149, %v223, 0
    %238 = vmatprep.subr.mxu0 0.0
    %239 = vmatpush1.msra.mxu0 0.0
    %240 = vmatprep.subr.mxu0 0.0
    %241 = vmatpush1.msra.mxu0 0.0
    %242 = vmatprep.subr.mxu0 0.0
    %243 = vmatpush1.msra.mxu0 0.0
    %244 = vmatprep.subr.mxu0 0.0
    %245 = vmatpush1.msra.mxu0 0.0
    %246 = vmatprep.subr.mxu0 0.0
    %247 = vmatpush1.msra.mxu0 0.0
    %248 = vmatprep.subr.mxu0 0.0
    %249 = vmatpush1.msra.mxu0 0.0
    %250 = vmatprep.subr.mxu0 0.0
    %251 = vmatpush1.msra.mxu0 0.0
    %252 = vmatprep.subr.mxu0 0.0
    %253 = vmatpush1.msra.mxu0 0.0
    %254 = vmatprep.subr.mxu0 0.0
    %255 = vmatpush1.msra.mxu0 0.0
    %256 = vmatprep.subr.mxu0 0.0
    %257 = vmatpush1.msra.mxu0 0.0
    %258 = vmatprep.subr.mxu0 0.0
    %259 = vmatpush1.msra.mxu0 0.0
    %260 = vmatprep.subr.mxu0 0.0
    %261 = vmatpush1.msra.mxu0 0.0
    %262 = vmatprep.subr.mxu0 0.0
    %263 = vmatpush1.msra.mxu0 %v227
    %264 = vmatprep.subr.mxu0 0.0
    %265 = vmatpush1.msra.mxu0 %v226
    %266 = vmatprep.subr.mxu0 0.0
    %267 = vmatpush1.msra.mxu0 %v225
    %268 = vmatprep.subr.mxu0 0.0
    %269 = vmatpush1.msra.mxu0 %v224
    %270 = vmatprep.subr.mxu0 0.0
    %271 = vmatpush2.msra.mxu0 0.0
    %272 = vmatprep.subr.mxu0 0.0
    %273 = vmatpush2.msra.mxu0 0.0
    %274 = vmatprep.subr.mxu0 0.0
    %275 = vmatpush2.msra.mxu0 0.0
    %276 = vmatprep.subr.mxu0 0.0
    %277 = vmatpush2.msra.mxu0 0.0
    %278 = vmatprep.subr.mxu0 0.0
    %279 = vmatpush2.msra.mxu0 0.0
    %280 = vmatprep.subr.mxu0 0.0
    %281 = vmatpush2.msra.mxu0 0.0
    %282 = vmatprep.subr.mxu0 0.0
    %283 = vmatpush2.msra.mxu0 0.0
    %284 = vmatprep.subr.mxu0 0.0
    %285 = vmatpush2.msra.mxu0 0.0
    %286 = vmatprep.subr.mxu0 0.0
    %287 = vmatpush2.msra.mxu0 0.0
    %288 = vmatprep.subr.mxu0 0.0
    %289 = vmatpush2.msra.mxu0 0.0
    %290 = vmatprep.subr.mxu0 0.0
    %291 = vmatpush2.msra.mxu0 0.0
    %292 = vmatprep.subr.mxu0 0.0
    %293 = vmatpush2.msra.mxu0 0.0
    %294 = vmatprep.subr.mxu0 0.0
    %295 = vmatpush2.msra.mxu0 0.0
    %296 = vmatprep.subr.mxu0 0.0
    %297 = vmatpush2.msra.mxu0 0.0
    %298 = vmatprep.subr.mxu0 0.0
    %299 = vmatpush2.msra.mxu0 0.0
    %300 = vmatprep.subr.mxu0 0.0
    %301 = vmatpush2.msra.mxu0 0.0
    %302 = vmatprep.mubr.f32.mxu0 0.0
    %303 = vmatmul.mubr.f32.gmra.mxu0 %v236
    %v304 = vpop.f32.mrf.mxu0
    %v305 = vadd.f32 %v233, %v304
    %v306 = vpop.f32.mrf.mxu0
    %307 = vdwg.mxu0
    %vm308 = vcmask 23552
    %309 = vst.msk [vmem:[%s7] sm:$0xff] %vm308, %v305
    // Predicated region
    $region38: #{tpu_custom_call.1} parent=1 // pred_check
      _
    $region39: #{tpu_custom_call.1} parent=1 // pred_check_branch
      %311 = sbr.rel (0) target = $region41
    $region40: #{tpu_custom_call.1} parent=1 // pred_region
      _
    $region41: #{tpu_custom_call.1} parent=1 // pred_fallthru
      _
    // Predicated region
    $region42: #{tpu_custom_call.1} parent=1 // pred_check
      _
    $region43: #{tpu_custom_call.1} parent=1 // pred_check_branch
      %313 = sbr.rel (0) target = $region45
    $region44: #{tpu_custom_call.1} parent=1 // pred_region
      _
    $region45: #{tpu_custom_call.1} parent=1 // pred_fallthru
      _
    %314 = vsyncpa [#allocation3], 1
    %315 = vsyncpa [#allocation5], 1

</llo_original>
